<compile_context>
chip_gen: v7x
topology: tpu7x:2x2x1
jax: 0.10.0
libtpu: 0.0.40
codegen_flags: <defaults>
</compile_context>

<pallas_src>
import functools

import jax
import jax.numpy as jnp
from jax.experimental import pallas as pl
from jax.experimental.pallas import tpu as pltpu


# --------------------------------------------------------------- kernels ----

def _excite_from_mean(mean_f32, w1t_ref, w2_ref):
    """gate = sigmoid(swish(mean @ W1^T) @ W2^T), computed on the VPU.

    mean_f32: (C, 1) f32 per-channel means
    w1t_ref:  (C, hidden)  first Linear weight, transposed to (in, out)
    w2_ref:   (C, hidden)  second Linear weight (torch layout (out, in))
    returns:  (C, 1) f32 gate
    """
    w1t = w1t_ref[...].astype(jnp.float32)          # (C, hidden)
    w2 = w2_ref[...].astype(jnp.float32)            # (C, hidden)
    h = jnp.sum(w1t * mean_f32, axis=0, keepdims=True)   # (1, hidden)
    h = h * jax.nn.sigmoid(h)                             # Swish
    s = jnp.sum(w2 * h, axis=-1, keepdims=True)           # (C, 1)
    return jax.nn.sigmoid(s)


def _fused_kernel(x_ref, w1t_ref, w2_ref, o_ref, *, inv_hw):
    """Single-read path: pool -> excite -> scale on a resident (C, HW) slab."""
    x = x_ref[...]                                                     # (C, HW)
    mean = jnp.sum(x, axis=-1, keepdims=True, dtype=jnp.float32) * inv_hw
    gate = _excite_from_mean(mean, w1t_ref, w2_ref)                    # (C, 1)
    o_ref[...] = x * gate.astype(x.dtype)


def _pool_excite_kernel(x_ref, w1t_ref, w2_ref, gate_ref, acc_ref, *,
                        inv_hw, hw, tile, mask_tail):
    """Streaming pool over HW tiles; excite folded into the last-tile epilogue.

    x_ref:    (C, T)      one HW tile of one batch element (native dtype)
    w1t_ref:  (C, hidden) resident weight
    w2_ref:   (C, hidden) resident weight
    gate_ref: (C, 1)      output gate (x.dtype), resident across the t axis
    acc_ref:  (C, 1)      f32 scratch accumulator
    """
    t = pl.program_id(1)

    @pl.when(t == 0)
    def _init():
        acc_ref[...] = jnp.zeros_like(acc_ref)

    x = x_ref[...]
    if mask_tail:
        # Ragged last tile: lanes >= HW contain garbage (no host-side pad),
        # mask them so the mean stays unbiased.
        lane = jax.lax.broadcasted_iota(jnp.int32, x.shape, 1)
        x = jnp.where(t * tile + lane < hw, x, jnp.zeros_like(x))
    acc_ref[...] += jnp.sum(x, axis=-1, keepdims=True, dtype=jnp.float32)

    @pl.when(t == pl.num_programs(1) - 1)
    def _finish():
        mean = acc_ref[...] * inv_hw
        gate = _excite_from_mean(mean, w1t_ref, w2_ref)
        gate_ref[...] = gate.astype(gate_ref.dtype)


def _scale_kernel(gate_ref, x_ref, o_ref):
    """o = x * gate, streaming over HW tiles (gate already in x.dtype)."""
    o_ref[...] = x_ref[...] * gate_ref[...]


# --------------------------------------------------------------- helpers ----

def _vmem_capacity_bytes():
    try:
        info = pltpu.get_tpu_info()
        cap = getattr(info, "vmem_capacity_bytes", None)
        if cap:
            return int(cap)
    except Exception:
        pass
    return 64 << 20  # conservative fallback (v7x physical VMEM)


def _choose_hw_tile(C, HW, itemsize, target_block_bytes):
    """Lane tile T (multiple of 128) so a (C, T) block is ~target_block_bytes."""
    lanes = max(128, (target_block_bytes // max(1, C * itemsize)) // 128 * 128)
    hw_ceil = -(-HW // 128) * 128
    T = int(min(lanes, hw_ceil))
    n_t = -(-HW // T)
    return T, n_t


# --------------------------------------------------------------- wrapper ----

def se_block(x_nchw, w1, w2, *, force_streaming=False, target_block_bytes=None):
    """SEBlock forward.

    x_nchw: (B, C, H, W)
    w1:     (C//r, C)  -- torch nn.Linear(C, C//r, bias=False).weight
    w2:     (C, C//r)  -- torch nn.Linear(C//r, C, bias=False).weight
    returns (B, C, H, W)
    """
    B, C, H, W = x_nchw.shape
    HW = H * W
    hidden = w1.shape[0]
    dtype = x_nchw.dtype
    itemsize = jnp.dtype(dtype).itemsize
    inv_hw = float(1.0 / HW)

    x_flat = x_nchw.reshape(B, C, HW)
    w1t = jnp.transpose(w1)          # (C, hidden); tiny one-time transpose
    # w2 is already (C, hidden) in torch layout.

    vmem_cap = _vmem_capacity_bytes()
    vmem_ceiling = (vmem_cap * 3) // 4        # 48 MiB on v7x, 96 MiB on v5e/v6e
    slab_bytes = C * HW * itemsize

    # --- fused single-read path ---------------------------------------------
    if (not force_streaming) and (slab_bytes * 6 + (2 << 20) <= vmem_ceiling):
        vmem_limit = int(min(max(32 << 20, slab_bytes * 6 + (4 << 20)),
                             vmem_ceiling))
        out_flat = pl.pallas_call(
            functools.partial(_fused_kernel, inv_hw=inv_hw),
            out_shape=jax.ShapeDtypeStruct((B, C, HW), dtype),
            grid_spec=pltpu.PrefetchScalarGridSpec(
                num_scalar_prefetch=0,
                grid=(B,),
                in_specs=[
                    pl.BlockSpec((pl.Squeezed(), C, HW), lambda b: (b, 0, 0)),
                    pl.BlockSpec((C, hidden), lambda b: (0, 0)),
                    pl.BlockSpec((C, hidden), lambda b: (0, 0)),
                ],
                out_specs=pl.BlockSpec((pl.Squeezed(), C, HW),
                                       lambda b: (b, 0, 0)),
            ),
            compiler_params=pltpu.CompilerParams(
                dimension_semantics=("parallel",),
                vmem_limit_bytes=vmem_limit,
            ),
        )(x_flat, w1t, w2)
        return out_flat.reshape(B, C, H, W)

    # --- streaming path (no host pad, no output slice) ----------------------
    if target_block_bytes is None:
        target_block_bytes = (12 << 20) if vmem_cap >= (100 << 20) else (8 << 20)
    T, n_t = _choose_hw_tile(C, HW, itemsize, target_block_bytes)
    block_bytes = C * T * itemsize
    vmem_limit = int(min(max(32 << 20, 4 * block_bytes + (8 << 20)),
                         vmem_ceiling))
    mask_tail = (HW % T) != 0

    # phase 1: per-channel pool + excite epilogue -> gate (B, C, 1) in x.dtype
    gate = pl.pallas_call(
        functools.partial(_pool_excite_kernel, inv_hw=inv_hw, hw=HW, tile=T,
                          mask_tail=mask_tail),
        out_shape=jax.ShapeDtypeStruct((B, C, 1), dtype),
        grid_spec=pltpu.PrefetchScalarGridSpec(
            num_scalar_prefetch=0,
            grid=(B, n_t),
            in_specs=[
                pl.BlockSpec((pl.Squeezed(), C, T), lambda b, t: (b, 0, t)),
                pl.BlockSpec((C, hidden), lambda b, t: (0, 0)),
                pl.BlockSpec((C, hidden), lambda b, t: (0, 0)),
            ],
            out_specs=pl.BlockSpec((pl.Squeezed(), C, 1), lambda b, t: (b, 0, 0)),
            scratch_shapes=[pltpu.VMEM((C, 1), jnp.float32)],
        ),
        compiler_params=pltpu.CompilerParams(
            dimension_semantics=("parallel", "arbitrary"),
            vmem_limit_bytes=vmem_limit,
        ),
    )(x_flat, w1t, w2)

    # phase 2: streaming gated copy (out-of-bounds lanes of the ragged last
    # tile are dropped by Pallas on writeback -- no slice afterwards).
    out_flat = pl.pallas_call(
        _scale_kernel,
        out_shape=jax.ShapeDtypeStruct((B, C, HW), dtype),
        grid_spec=pltpu.PrefetchScalarGridSpec(
            num_scalar_prefetch=0,
            grid=(B, n_t),
            in_specs=[
                pl.BlockSpec((pl.Squeezed(), C, 1), lambda b, t: (b, 0, 0)),
                pl.BlockSpec((pl.Squeezed(), C, T), lambda b, t: (b, 0, t)),
            ],
            out_specs=pl.BlockSpec((pl.Squeezed(), C, T), lambda b, t: (b, 0, t)),
        ),
        compiler_params=pltpu.CompilerParams(
            dimension_semantics=("parallel", "parallel"),
            vmem_limit_bytes=vmem_limit,
        ),
    )(gate, x_flat)

    return out_flat.reshape(B, C, H, W)


def _reference(x_nchw, w1, w2):
    # Pure-JAX reference of SEBlock.forward.
    y = jnp.mean(x_nchw, axis=(2, 3))             # (B, C)
    h = y @ w1.T                                   # (B, C//r)
    h = h * jax.nn.sigmoid(h)                      # Swish
    s = jax.nn.sigmoid(h @ w2.T)                   # (B, C)
    return x_nchw * s[:, :, None, None]


if __name__ == "__main__":
    key = jax.random.PRNGKey(0)
    kx, k1, k2, kx2 = jax.random.split(key, 4)

    # Shapes consistent with the module: reduction=16 => C >= 16.
    B, C, H, W = 2, 32, 16, 16
    reduction = 16
    hidden = C // reduction  # 2

    x = jax.random.normal(kx, (B, C, H, W), dtype=jnp.float32)
    # Torch Linear layout: weight is (out, in).
    lim1 = 1.0 / (C ** 0.5)
    lim2 = 1.0 / (hidden ** 0.5)
    w1 = jax.random.uniform(k1, (hidden, C), dtype=jnp.float32,
                            minval=-lim1, maxval=lim1)
    w2 = jax.random.uniform(k2, (C, hidden), dtype=jnp.float32,
                            minval=-lim2, maxval=lim2)

    # Case 1: fused single-read path (slab fits in VMEM).
    out = jax.block_until_ready(se_block(x, w1, w2))
    ref = _reference(x, w1, w2)
    assert out.shape == (B, C, H, W)
    assert jnp.allclose(out, ref, atol=1e-5, rtol=1e-5), "fused path mismatch"

    # Case 2: streaming path with a ragged last HW tile (HW = 169, tile = 128),
    # exercising the in-kernel mask and out-of-bounds-write dropping.
    B2, H2, W2 = 2, 13, 13
    x2 = jax.random.normal(kx2, (B2, C, H2, W2), dtype=jnp.float32)
    out2 = jax.block_until_ready(
        se_block(x2, w1, w2, force_streaming=True,
                 target_block_bytes=128 * C * 4))
    ref2 = _reference(x2, w1, w2)
    assert out2.shape == (B2, C, H2, W2)
    assert jnp.allclose(out2, ref2, atol=1e-5, rtol=1e-5), "streaming mismatch"

    print("KERNEL_OK")
</pallas_src>

<mosaic_0001>
module attributes {stable_mosaic.version = 11 : i64} {
  func.func @_fused_kernel(%arg0: i32, %arg1: memref<1x32x256xf32, #tpu.memory_space<vmem>>, %arg2: memref<32x2xf32, #tpu.memory_space<vmem>>, %arg3: memref<32x2xf32, #tpu.memory_space<vmem>>, %arg4: memref<1x32x256xf32, #tpu.memory_space<vmem>>) attributes {dimension_semantics = [#tpu.dimension_semantics<parallel>], iteration_bounds = array<i64: 2>, scalar_prefetch = 0 : i64, scratch_operands = 0 : i64, tpu.core_type = #tpu.core_type<tc>, window_params = [{transform_indices = @transform_0, window_bounds = array<i64: 1, 32, 256>}, {pipeline_mode = #tpu.pipeline_mode<synchronous>, transform_indices = @transform_1, window_bounds = array<i64: 32, 2>}, {pipeline_mode = #tpu.pipeline_mode<synchronous>, transform_indices = @transform_2, window_bounds = array<i64: 32, 2>}, {transform_indices = @transform_3, window_bounds = array<i64: 1, 32, 256>}]} {
    %c0 = arith.constant 0 : index
    %c0_0 = arith.constant 0 : index
    %c0_1 = arith.constant 0 : index
    %0 = vector.load %arg1[%c0, %c0_0, %c0_1] : memref<1x32x256xf32, #tpu.memory_space<vmem>>, vector<1x32x256xf32>
    %1 = vector.shape_cast %0 : vector<1x32x256xf32> to vector<32x256xf32>
    %cst = arith.constant dense<0.000000e+00> : vector<32xf32>
    %2 = vector.multi_reduction <add>, %1, %cst [1] : vector<32x256xf32> to vector<32xf32>
    %3 = vector.shape_cast %2 : vector<32xf32> to vector<32x1xf32>
    %cst_2 = arith.constant 3.906250e-03 : f32
    %4 = vector.broadcast %cst_2 : f32 to vector<32x1xf32>
    %5 = arith.mulf %3, %4 : vector<32x1xf32>
    %c0_3 = arith.constant 0 : index
    %c0_4 = arith.constant 0 : index
    %6 = vector.load %arg2[%c0_3, %c0_4] : memref<32x2xf32, #tpu.memory_space<vmem>>, vector<32x2xf32>
    %c0_5 = arith.constant 0 : index
    %c0_6 = arith.constant 0 : index
    %7 = vector.load %arg3[%c0_5, %c0_6] : memref<32x2xf32, #tpu.memory_space<vmem>>, vector<32x2xf32>
    %8 = vector.broadcast %5 : vector<32x1xf32> to vector<32x2xf32>
    %9 = arith.mulf %6, %8 : vector<32x2xf32>
    %cst_7 = arith.constant dense<0.000000e+00> : vector<2xf32>
    %10 = vector.multi_reduction <add>, %9, %cst_7 [0] : vector<32x2xf32> to vector<2xf32>
    %11 = vector.shape_cast %10 : vector<2xf32> to vector<1x2xf32>
    %12 = arith.negf %11 : vector<1x2xf32>
    %13 = math.exp %12 : vector<1x2xf32>
    %cst_8 = arith.constant 1.000000e+00 : f32
    %14 = vector.broadcast %cst_8 : f32 to vector<1x2xf32>
    %15 = arith.addf %14, %13 : vector<1x2xf32>
    %16 = arith.divf %14, %15 : vector<1x2xf32>
    %17 = arith.mulf %11, %16 : vector<1x2xf32>
    %18 = vector.broadcast %17 : vector<1x2xf32> to vector<32x2xf32>
    %19 = arith.mulf %7, %18 : vector<32x2xf32>
    %cst_9 = arith.constant dense<0.000000e+00> : vector<32xf32>
    %20 = vector.multi_reduction <add>, %19, %cst_9 [1] : vector<32x2xf32> to vector<32xf32>
    %21 = vector.shape_cast %20 : vector<32xf32> to vector<32x1xf32>
    %22 = arith.negf %21 : vector<32x1xf32>
    %23 = math.exp %22 : vector<32x1xf32>
    %cst_10 = arith.constant 1.000000e+00 : f32
    %24 = vector.broadcast %cst_10 : f32 to vector<32x1xf32>
    %25 = arith.addf %24, %23 : vector<32x1xf32>
    %26 = arith.divf %24, %25 : vector<32x1xf32>
    %27 = vector.broadcast %26 : vector<32x1xf32> to vector<32x256xf32>
    %28 = arith.mulf %1, %27 : vector<32x256xf32>
    %c0_11 = arith.constant 0 : index
    %c0_12 = arith.constant 0 : index
    %c0_13 = arith.constant 0 : index
    %29 = vector.load %arg4[%c0_11, %c0_12, %c0_13] : memref<1x32x256xf32, #tpu.memory_space<vmem>>, vector<1x32x256xf32>
    %30 = vector.shape_cast %29 : vector<1x32x256xf32> to vector<32x256xf32>
    %31 = vector.shape_cast %28 : vector<32x256xf32> to vector<1x32x256xf32>
    tpu.vector_store %arg4[%c0_11, %c0_12, %c0_13], %31 {strides = array<i32>} : memref<1x32x256xf32, #tpu.memory_space<vmem>>, vector<1x32x256xf32>,
    return
  }
  func.func @transform_0(%arg0: i32) -> (i32, i32, i32) {
    %c0_i32 = arith.constant 0 : i32
    %c0_i32_0 = arith.constant 0 : i32
    %c0_i32_1 = arith.constant 0 : i32
    return %arg0, %c0_i32, %c0_i32_0 : i32, i32, i32
  }
  func.func @transform_1(%arg0: i32) -> (i32, i32) {
    %c0_i32 = arith.constant 0 : i32
    %c0_i32_0 = arith.constant 0 : i32
    %c0_i32_1 = arith.constant 0 : i32
    return %c0_i32, %c0_i32_0 : i32, i32
  }
  func.func @transform_2(%arg0: i32) -> (i32, i32) {
    %c0_i32 = arith.constant 0 : i32
    %c0_i32_0 = arith.constant 0 : i32
    %c0_i32_1 = arith.constant 0 : i32
    return %c0_i32, %c0_i32_0 : i32, i32
  }
  func.func @transform_3(%arg0: i32) -> (i32, i32, i32) {
    %c0_i32 = arith.constant 0 : i32
    %c0_i32_0 = arith.constant 0 : i32
    %c0_i32_1 = arith.constant 0 : i32
    return %arg0, %c0_i32, %c0_i32_0 : i32, i32, i32
  }
}

</mosaic_0001>

<llo_original>
// kernel: tpu_custom_call.1
$region0: #{tpu_custom_call.1}
  #allocation0 [shape = 'u32[]', space=smem, size = 0x4, offset = 0x4, fixed_abs, tag = 'smem constant byte address 0x4 - core index']
  #allocation1 [shape = 'u32[144,128]{1,0:T(1,128)}', space=vmem, size = 0x12000, scoped, tag = 'internal scratch']
  %s0 = inlined_call_operand.hbm [shape: f32[2,32,256], index: 0, kind: input, shape index: {}]
  %s1 = inlined_call_operand.vmem [shape: f32[32,2], index: 1, kind: input, shape index: {}]
  %s2 = inlined_call_operand.vmem [shape: f32[32,2], index: 2, kind: input, shape index: {}]
  %s3 = inlined_call_operand.hbm [shape: f32[2,32,256], index: 3, kind: output, shape index: {}]
  %s4 = sld [smem:[#allocation0]]
  $region49: #{tpu_custom_call.1} parent=0
    _
  %s6 = ssub.s32 1, %s4
  %s7 = scalar_select 0, %s6, %s4
  $region1: #{tpu_custom_call.1} parent=0
    #allocation2 [shape = 'u8[65536]{0}', space=vmem, size = 0x10000, scoped, tag = 'input window, operand 0']
    #allocation3 [shape = 's32[2]{0}', space=sflag, size = 0x8, scoped, tag = 'scoped memory for tpu_custom_call.1']
    #allocation4 [shape = 's32[2]{0}', space=sflag, size = 0x8, scoped, tag = 'scoped memory for tpu_custom_call.1']
    #allocation5 [shape = 'u8[65536]{0}', space=vmem, size = 0x10000, scoped, tag = 'output window, operand 0']
    %8 = vsyncpa [#allocation3], 0
    %s9 = scalar_lea.sflag [#allocation3], 1
    %10 = vsyncpa %s9, 0
    %11 = vsyncpa [#allocation4], 0
    %s12 = scalar_lea.sflag [#allocation4], 1
    %13 = vsyncpa %s12, 0
    loop: start=0, step=1, limit=4
    $region2: #{tpu_custom_call.1} parent=1 // loop_pre_header
      _
    $region3: #{tpu_custom_call.1} parent=1 // loop_header
      %s15 = sphi 0, %s19
      %p16 = scmp.ge.s32.totalorder %s15, 4
      %s25 = sphi 0, %s27
      %s28 = sphi 0, %s25
      %s29 = sphi 0, %s28
      %s45 = sphi 0, %s29
      %s49 = sphi 0, %s49
      %s51 = sphi 0, %s49
      %s52 = sphi 0, %s51
      %s66 = sphi 0, %s52
      %s70 = sphi 0, %s70
      %s72 = sphi 0, %s70
      %s73 = sphi 0, %s72
      %s87 = sphi 0, %s73
      %s93 = sphi 0, %s95
      %s96 = sphi 0, %s93
      %s97 = sphi 0, %s96
      %s113 = sphi 0, %s97
    $region4: #{tpu_custom_call.1} parent=1 // loop_header_branch
      %18 = sbr.rel (%p16) target = $region8
    $region5: #{tpu_custom_call.1} parent=1 // loop_body
      %s20 = ssub.s32 %s15, 1
      %s21 = ssub.s32 %s15, 2
      %s22 = sadd.s32 %s15, 1
      %s23 = ssub.s32 %s15, %s22
      %p24 = scmp.eq.s32.totalorder %s23, 0
      %s26 = sadd.s32 %s25, 1
      %s27 = scalar_select %p24, %s25, %s26
      %p30 = pneg %p24
      %p31 = scmp.eq.s32.totalorder %s15, 1
      %p32 = por %p30, %p31
      %p33 = scmp.ne.s32.totalorder %s25, %s28
      %p34 = scmp.eq.s32.totalorder %s15, 0
      %p35 = por %p33, %p34
      %p36 = scmp.ne.s32.totalorder %s25, %s28
      %p37 = scmp.eq.s32.totalorder %s20, 1
      %p38 = por %p36, %p37
      %p39 = scmp.ne.s32.totalorder %s28, %s29
      %p40 = scmp.eq.s32.totalorder %s20, 0
      %p41 = por %p39, %p40
      %p42 = scmp.ne.s32.totalorder %s28, %s29
      %p43 = scmp.eq.s32.totalorder %s21, 1
      %p44 = por %p42, %p43
      %p46 = scmp.ne.s32.totalorder %s29, %s45
      %p47 = scmp.eq.s32.totalorder %s21, 0
      %p48 = por %p46, %p47
      %s50 = sadd.s32 %s49, 1
      %p53 = scmp.eq.s32.totalorder %s15, 1
      %p54 = scmp.ne.s32.totalorder %s49, %s51
      %p55 = scmp.eq.s32.totalorder %s15, 0
      %p56 = por %p54, %p55
      %p57 = scmp.ne.s32.totalorder %s49, %s51
      %p58 = scmp.eq.s32.totalorder %s20, 1
      %p59 = por %p57, %p58
      %p60 = scmp.ne.s32.totalorder %s51, %s52
      %p61 = scmp.eq.s32.totalorder %s20, 0
      %p62 = por %p60, %p61
      %p63 = scmp.ne.s32.totalorder %s51, %s52
      %p64 = scmp.eq.s32.totalorder %s21, 1
      %p65 = por %p63, %p64
      %p67 = scmp.ne.s32.totalorder %s52, %s66
      %p68 = scmp.eq.s32.totalorder %s21, 0
      %p69 = por %p67, %p68
      %s71 = sadd.s32 %s70, 1
      %p74 = scmp.eq.s32.totalorder %s15, 1
      %p75 = scmp.ne.s32.totalorder %s70, %s72
      %p76 = scmp.eq.s32.totalorder %s15, 0
      %p77 = por %p75, %p76
      %p78 = scmp.ne.s32.totalorder %s70, %s72
      %p79 = scmp.eq.s32.totalorder %s20, 1
      %p80 = por %p78, %p79
      %p81 = scmp.ne.s32.totalorder %s72, %s73
      %p82 = scmp.eq.s32.totalorder %s20, 0
      %p83 = por %p81, %p82
      %p84 = scmp.ne.s32.totalorder %s72, %s73
      %p85 = scmp.eq.s32.totalorder %s21, 1
      %p86 = por %p84, %p85
      %p88 = scmp.ne.s32.totalorder %s73, %s87
      %p89 = scmp.eq.s32.totalorder %s21, 0
      %p90 = por %p88, %p89
      %s91 = ssub.s32 %s15, %s22
      %p92 = scmp.eq.s32.totalorder %s91, 0
      %s94 = sadd.s32 %s93, 1
      %s95 = scalar_select %p92, %s93, %s94
      %p98 = pneg %p92
      %p99 = scmp.eq.s32.totalorder %s15, 1
      %p100 = por %p98, %p99
      %p101 = scmp.ne.s32.totalorder %s93, %s96
      %p102 = scmp.eq.s32.totalorder %s15, 0
      %p103 = por %p101, %p102
      %p104 = scmp.ne.s32.totalorder %s93, %s96
      %p105 = scmp.eq.s32.totalorder %s20, 1
      %p106 = por %p104, %p105
      %p107 = scmp.ne.s32.totalorder %s96, %s97
      %p108 = scmp.eq.s32.totalorder %s20, 0
      %p109 = por %p107, %p108
      %p110 = scmp.ne.s32.totalorder %s96, %s97
      %p111 = scmp.eq.s32.totalorder %s21, 1
      %p112 = por %p110, %p111
      %p114 = scmp.ne.s32.totalorder %s97, %s113
      %p115 = scmp.eq.s32.totalorder %s21, 0
      %p116 = por %p114, %p115
      %p117 = scmp.le.s32.totalorder 1, %s15
      %p118 = scmp.lt.s32.totalorder %s15, 3
      %p119 = pnand %p117, %p118
      %p120 = pneg %p119
      // Predicated region
      $region9: #{tpu_custom_call.1} parent=5 // pred_check
        _
      $region10: #{tpu_custom_call.1} parent=5 // pred_check_branch
        %122 = sbr.rel (%p119) target = $region12
      $region11: #{tpu_custom_call.1} parent=5 // pred_region
        %s123 = ssub.s32 %s15, 1
        // Predicated region
        $region13: #{tpu_custom_call.1} parent=11 // pred_check
          %p124 = pneg %p62
        $region14: #{tpu_custom_call.1} parent=11 // pred_check_branch
          %126 = sbr.rel (%p124) target = $region16
        $region15: #{tpu_custom_call.1} parent=11 // pred_region
          _
        $region16: #{tpu_custom_call.1} parent=11 // pred_fallthru
          _
        // Predicated region
        $region17: #{tpu_custom_call.1} parent=11 // pred_check
          %p127 = pneg %p83
        $region18: #{tpu_custom_call.1} parent=11 // pred_check_branch
          %129 = sbr.rel (%p127) target = $region20
        $region19: #{tpu_custom_call.1} parent=11 // pred_region
          _
        $region20: #{tpu_custom_call.1} parent=11 // pred_fallthru
          _
      $region12: #{tpu_custom_call.1} parent=5 // pred_fallthru
        _
      %p130 = scmp.lt.s32.totalorder %s15, 2
      // Predicated region
      $region21: #{tpu_custom_call.1} parent=5 // pred_check
        %p131 = pneg %p130
      $region22: #{tpu_custom_call.1} parent=5 // pred_check_branch
        %133 = sbr.rel (%p131) target = $region24
      $region23: #{tpu_custom_call.1} parent=5 // pred_region
        // Predicated region
        $region25: #{tpu_custom_call.1} parent=23 // pred_check
          %p134 = pneg %p35
        $region26: #{tpu_custom_call.1} parent=23 // pred_check_branch
          %136 = sbr.rel (%p134) target = $region28
        $region27: #{tpu_custom_call.1} parent=23 // pred_region
          %s137 = sand.u32 %s25, 1
          %s138 = scalar_lea.sflag [#allocation3], %s137
          %s139 = sand.u32 %s25, 1
          %s140 = smul.addr %s139, 64
          %s141 = scalar_lea.vmem [#allocation2], %s140
          %s143 = ssub.s32 1024, 1024
          %144 = vsyncadd %s138, %s143
          %s145 = smul.addr %s15, 8
          %s146 = smul.addr %s145, 128
          %s147 = scalar_lea.hbm %s0, %s146
          %s148 = sshll.u32 %s141, 4
          %s149 = int_to_ptr.vmem [resolvable:$true] %s148
          %154 = dma.hbm_to_vmem [thread:$0]  %s147, 1024, %s149, %s138, 256, 256, 16
        $region28: #{tpu_custom_call.1} parent=23 // pred_fallthru
          _
      $region24: #{tpu_custom_call.1} parent=5 // pred_fallthru
        _
      %p155 = scmp.le.s32.totalorder 1, %s15
      %p156 = scmp.lt.s32.totalorder %s15, 3
      %p157 = pnand %p155, %p156
      %p158 = pneg %p157
      // Predicated region
      $region29: #{tpu_custom_call.1} parent=5 // pred_check
        _
      $region30: #{tpu_custom_call.1} parent=5 // pred_check_branch
        %160 = sbr.rel (%p157) target = $region32
      $region31: #{tpu_custom_call.1} parent=5 // pred_region
        %s161 = ssub.s32 %s15, 1
        %s162 = sand.u32 %s28, 1
        %s163 = scalar_lea.sflag [#allocation3], %s162
        %s164 = sand.u32 %s28, 1
        %s165 = smul.addr %s164, 64
        %s166 = scalar_lea.vmem [#allocation2], %s165
        // Predicated region
        $region33: #{tpu_custom_call.1} parent=31 // pred_check
          %p167 = pneg %p41
        $region34: #{tpu_custom_call.1} parent=31 // pred_check_branch
          %169 = sbr.rel (%p167) target = $region36
        $region35: #{tpu_custom_call.1} parent=31 // pred_region
          %170 = dma.done %s163, 1024
        $region36: #{tpu_custom_call.1} parent=31 // pred_fallthru
          _
        %s171 = sand.u32 %s28, 1
        %s172 = scalar_lea.sflag [#allocation3], %s171
        %s173 = sand.u32 %s28, 1
        %s174 = smul.addr %s173, 64
        %s175 = scalar_lea.vmem [#allocation2], %s174
        %p176 = pneg %p41
        %p177 = pneg %p38
        %p178 = pneg %p62
        %p179 = pneg %p59
        %p180 = pneg %p83
        %p181 = pneg %p80
        %p182 = pneg %p109
        %p183 = pneg %p106
        %s184 = sand.u32 %s96, 1
        %s185 = scalar_lea.sflag [#allocation4], %s184
        %s186 = sand.u32 %s96, 1
        %s187 = smul.addr %s186, 64
        %s188 = scalar_lea.vmem [#allocation5], %s187
        %v189 = vld [vmem:[%s166] sm:$0xff]
        %v190 = vld [vmem:[%s166 + $0x8] sm:$0xff]
        %v191 = vld [vmem:[%s166 + $0x10] sm:$0xff]
        %v192 = vld [vmem:[%s166 + $0x18] sm:$0xff]
        %v193 = vld [vmem:[%s166 + $0x20] sm:$0xff]
        %v194 = vld [vmem:[%s166 + $0x28] sm:$0xff]
        %v195 = vld [vmem:[%s166 + $0x30] sm:$0xff]
        %v196 = vld [vmem:[%s166 + $0x38] sm:$0xff]
        %v197 = vadd.f32 %v189, %v190
        %198 = vadd.xlane.f32.xlu0 %v197
        %v199 = vpop.xlane.xlu0 %198
        %v200 = vadd.f32 %v191, %v192
        %201 = vadd.xlane.f32.xlu0 %v200
        %v202 = vpop.xlane.xlu0 %201
        %v203 = vadd.f32 %v193, %v194
        %204 = vadd.xlane.f32.xlu0 %v203
        %v205 = vpop.xlane.xlu0 %204
        %v206 = vadd.f32 %v195, %v196
        %207 = vadd.xlane.f32.xlu0 %v206
        %v208 = vpop.xlane.xlu0 %207
        %v209 = vmul.f32 %v199, 0.00390625
        %v210 = vmul.f32 %v202, 0.00390625
        %v211 = vmul.f32 %v205, 0.00390625
        %v212 = vmul.f32 %v208, 0.00390625
        %v213 = vld [vmem:[%s1] sm:$0xff]
        %v214 = vld [vmem:[%s1 + $0x8] sm:$0xff]
        %v215 = vld [vmem:[%s1 + $0x10] sm:$0xff]
        %v216 = vld [vmem:[%s1 + $0x18] sm:$0xff]
        %v217 = vld [vmem:[%s2] sm:$0xff]
        %v218 = vld [vmem:[%s2 + $0x8] sm:$0xff]
        %v219 = vld [vmem:[%s2 + $0x10] sm:$0xff]
        %v220 = vld [vmem:[%s2 + $0x18] sm:$0xff]
        %v221 = vmul.f32 %v213, %v209
        %v222 = vmul.f32 %v214, %v210
        %v223 = vmul.f32 %v215, %v211
        %v224 = vmul.f32 %v216, %v212
        %vm225 = vcmask 15360
        %v226 = vsel %vm225, %v221, 0.0
        %v227 = vsel %vm225, %v222, 0.0
        %v228 = vadd.f32 %v226, %v227
        %v229 = vsel %vm225, %v223, 0.0
        %v230 = vadd.f32 %v228, %v229
        %v231 = vsel %vm225, %v224, 0.0
        %v232 = vadd.f32 %v230, %v231
        %v233 = vrot.slane %v232, 4
        %v234 = vadd.f32 %v232, %v233
        %v235 = vrot.slane %v234, 2
        %v236 = vadd.f32 %v234, %v235
        %v237 = vrot.slane %v236, 1
        %v238 = vadd.f32 %v236, %v237
        %v239 = vxor.u32 %v238, 2147483648
        %v240 = vmul.f32 %v239, 1.442695
        %v241 = vpow.pop %v240
        %v242 = vadd.f32 %v241, 1.0
        %v243 = vrcp.pop %v242
        %v244 = vmul.f32 1.0, %v243
        %v245 = vmul.f32 %v238, %v244
        %v246 = vmul.f32 %v217, %v245
        %v247 = vmul.f32 %v218, %v245
        %v248 = vmul.f32 %v219, %v245
        %v249 = vmul.f32 %v220, %v245
        %v250 = vsel %vm225, %v246, 0.0
        %251 = vadd.xlane.f32.xlu0 %v250
        %v252 = vpop.xlane.xlu0 %251
        %v253 = vsel %vm225, %v247, 0.0
        %254 = vadd.xlane.f32.xlu0 %v253
        %v255 = vpop.xlane.xlu0 %254
        %v256 = vsel %vm225, %v248, 0.0
        %257 = vadd.xlane.f32.xlu0 %v256
        %v258 = vpop.xlane.xlu0 %257
        %v259 = vsel %vm225, %v249, 0.0
        %260 = vadd.xlane.f32.xlu0 %v259
        %v261 = vpop.xlane.xlu0 %260
        %v262 = vxor.u32 %v252, 2147483648
        %v263 = vxor.u32 %v255, 2147483648
        %v264 = vxor.u32 %v258, 2147483648
        %v265 = vxor.u32 %v261, 2147483648
        %v266 = vmul.f32 %v262, 1.442695
        %v267 = vpow.pop %v266
        %v268 = vmul.f32 %v263, 1.442695
        %v269 = vpow.pop %v268
        %v270 = vmul.f32 %v264, 1.442695
        %v271 = vpow.pop %v270
        %v272 = vmul.f32 %v265, 1.442695
        %v273 = vpow.pop %v272
        %v274 = vadd.f32 %v267, 1.0
        %v275 = vadd.f32 %v269, 1.0
        %v276 = vadd.f32 %v271, 1.0
        %v277 = vadd.f32 %v273, 1.0
        %v278 = vrcp.pop %v274
        %v279 = vmul.f32 1.0, %v278
        %v280 = vrcp.pop %v275
        %v281 = vmul.f32 1.0, %v280
        %v282 = vrcp.pop %v276
        %v283 = vmul.f32 1.0, %v282
        %v284 = vrcp.pop %v277
        %v285 = vmul.f32 1.0, %v284
        %v286 = vmul.f32 %v189, %v279
        %v287 = vmul.f32 %v190, %v279
        %v288 = vmul.f32 %v191, %v281
        %v289 = vmul.f32 %v192, %v281
        %v290 = vmul.f32 %v193, %v283
        %v291 = vmul.f32 %v194, %v283
        %v292 = vmul.f32 %v195, %v285
        %v293 = vmul.f32 %v196, %v285
        %294 = vst [vmem:[%s188] sm:$0xff] %v286
        %295 = vst [vmem:[%s188 + $0x8] sm:$0xff] %v287
        %296 = vst [vmem:[%s188 + $0x10] sm:$0xff] %v288
        %297 = vst [vmem:[%s188 + $0x18] sm:$0xff] %v289
        %298 = vst [vmem:[%s188 + $0x20] sm:$0xff] %v290
        %299 = vst [vmem:[%s188 + $0x28] sm:$0xff] %v291
        %300 = vst [vmem:[%s188 + $0x30] sm:$0xff] %v292
        %301 = vst [vmem:[%s188 + $0x38] sm:$0xff] %v293
        %s302 = sand.u32 %s96, 1
        %s303 = scalar_lea.sflag [#allocation4], %s302
        %s304 = sand.u32 %s96, 1
        %s305 = smul.addr %s304, 64
        %s306 = scalar_lea.vmem [#allocation5], %s305
        // Predicated region
        $region37: #{tpu_custom_call.1} parent=31 // pred_check
          %p307 = pneg %p106
        $region38: #{tpu_custom_call.1} parent=31 // pred_check_branch
          %309 = sbr.rel (%p307) target = $region40
        $region39: #{tpu_custom_call.1} parent=31 // pred_region
          %s311 = ssub.s32 1024, 1024
          %312 = vsyncadd %s303, %s311
          %s313 = smul.addr %s20, 8
          %s314 = smul.addr %s313, 128
          %s315 = scalar_lea.hbm %s3, %s314
          %s316 = sshll.u32 %s306, 4
          %s317 = int_to_ptr.vmem [resolvable:$true] %s316
          %322 = dma.vmem_to_hbm [thread:$0]  %s317, 1024, %s315, %s303, 256, 256, 16
        $region40: #{tpu_custom_call.1} parent=31 // pred_fallthru
          _
      $region32: #{tpu_custom_call.1} parent=5 // pred_fallthru
        _
      %p323 = scmp.le.s32.totalorder 2, %s15
      // Predicated region
      $region41: #{tpu_custom_call.1} parent=5 // pred_check
        %p324 = pneg %p323
      $region42: #{tpu_custom_call.1} parent=5 // pred_check_branch
        %326 = sbr.rel (%p324) target = $region44
      $region43: #{tpu_custom_call.1} parent=5 // pred_region
        %s327 = ssub.s32 %s15, 2
        // Predicated region
        $region45: #{tpu_custom_call.1} parent=43 // pred_check
          %p328 = pneg %p112
        $region46: #{tpu_custom_call.1} parent=43 // pred_check_branch
          %330 = sbr.rel (%p328) target = $region48
        $region47: #{tpu_custom_call.1} parent=43 // pred_region
          %s331 = sand.u32 %s97, 1
          %s332 = scalar_lea.sflag [#allocation4], %s331
          %s333 = sand.u32 %s97, 1
          %s334 = smul.addr %s333, 64
          %s335 = scalar_lea.vmem [#allocation5], %s334
          %336 = dma.done %s332, 1024
        $region48: #{tpu_custom_call.1} parent=43 // pred_fallthru
          _
      $region44: #{tpu_custom_call.1} parent=5 // pred_fallthru
        _
    $region6: #{tpu_custom_call.1} parent=1 // loop_footer
      %s19 = sadd.s32 1, %s15
    $region7: #{tpu_custom_call.1} parent=1 // loop_footer_branch
      %14 = sbr.rel target = $region3
    $region8: #{tpu_custom_call.1} parent=1 // loop_exit
      _
    %337 = vsyncpa [#allocation3], 1
    %s338 = scalar_lea.sflag [#allocation3], 1
    %339 = vsyncpa %s338, 1
    %340 = vsyncpa [#allocation4], 1
    %s341 = scalar_lea.sflag [#allocation4], 1
    %342 = vsyncpa %s341, 1

</llo_original>
